<compile_context>
chip_gen: v7x
topology: tpu7x:2x2x1
jax: 0.10.0
libtpu: 0.0.40
codegen_flags: <defaults>
</compile_context>

<pallas_src>
import functools

import numpy as np
import jax
import jax.numpy as jnp
from jax.experimental import pallas as pl
from jax.experimental.pallas import tpu as pltpu


def _round_up(x, m):
    return (x + m - 1) // m * m


def _mi_pab_kernel(yt_ref, yp_ref, pab_ref, *,
                   preterm, max_clip, minval, bin_width, num_bins,
                   n_valid, tile_n, tiles_per_chunk, need_mask, compute_dtype):
    """Accumulate the un-normalized joint soft histogram pab (K, K) for one
    (batch, chunk) pair across the voxel-tile reduction axis."""
    c = pl.program_id(1)                     # voxel-chunk index  ("parallel")
    n = pl.program_id(2)                     # voxel-tile index   ("arbitrary")

    @pl.when(n == 0)
    def _():
        pab_ref[...] = jnp.zeros_like(pab_ref)

    # Bin centers baked as an f32 constant on the sublane axis: (K, 1).
    bins = minval + bin_width * (
        jax.lax.broadcasted_iota(jnp.int32, (num_bins, 1), 0)
        .astype(jnp.float32))

    yt = jnp.clip(yt_ref[0, 0], 0.0, max_clip)             # (1, TILE_N) f32
    yp = jnp.clip(yp_ref[0, 0], 0.0, max_clip)             # (1, TILE_N) f32

    # Gaussian soft assignment, bins on sublanes / voxels lane-dense:
    # (K, TILE_N).  Differences are formed in f32 (keeps the bin-center
    # geometry exact); on bf16-capable chips the square/exp hot path then runs
    # in bf16 (2x VPU/EUP throughput per vreg, half the slab VMEM).
    da = (yt - bins).astype(compute_dtype)
    I_a = jnp.exp(-preterm * da * da)                      # compute_dtype
    db = (yp - bins).astype(compute_dtype)
    I_b = jnp.exp(-preterm * db * db)                      # compute_dtype

    # Fused per-voxel normalization: pab[k,l] = sum_v Ia*Ib / (sum_a*sum_b)
    # is algebraically identical to normalizing each slab separately, so we
    # pay ONE reciprocal and ONE (K, TILE_N) broadcast multiply instead of two.
    # Per-voxel sums and the reciprocal stay in f32 (a 32-term bf16
    # accumulation would be too lossy).
    sum_a = jnp.sum(I_a, axis=0, keepdims=True, dtype=jnp.float32)  # (1, TILE_N)
    sum_b = jnp.sum(I_b, axis=0, keepdims=True, dtype=jnp.float32)  # (1, TILE_N)
    w = pl.reciprocal(sum_a * sum_b, approx=False)

    if need_mask:
        # Zero padded voxels through the per-voxel weight.  NOTE: this
        # (together with dividing by the TRUE voxel count in the wrapper) is
        # what keeps the pa/pb row/col-sum-of-pab identity exact -- keep the
        # mask on the weight, not on just one slab.
        lane = jax.lax.broadcasted_iota(jnp.int32, (1, tile_n), 1)
        tile_idx = c * tiles_per_chunk + n
        valid = (tile_idx * tile_n + lane) < n_valid
        w = jnp.where(valid, w, 0.0)

    I_aw = I_a * w.astype(compute_dtype)                   # (K, TILE_N)

    # Joint histogram partial: contract over the voxel (lane) axis -> (K, K).
    # bf16 operands are the MXU's native dtype; accumulation is f32.  The
    # output block is resident across the "arbitrary" voxel axis, so it acts
    # as the accumulator (no scratch needed).
    partial = jax.lax.dot_general(
        I_aw, I_b, (((1,), (1,)), ((), ())),
        preferred_element_type=jnp.float32)                # (K, K) f32
    pab_ref[...] += partial[None, None, :, :]


def mutual_information_forward(y_true, y_pred, *, sigma_ratio=1.0,
                               minval=0.0, maxval=1.0, num_bins=32,
                               use_bf16=None, max_tile_voxels=None,
                               vmem_limit_bytes=None):
    """Returns -MI(y_true, y_pred), matching MutualInformation.forward."""
    # Parameter setup identical to the PyTorch __init__ (deterministic).
    bin_centers = np.linspace(minval, maxval, num=num_bins)
    bin_width = float(bin_centers[1] - bin_centers[0])
    sigma = float(np.mean(np.diff(bin_centers))) * sigma_ratio
    preterm = 1.0 / (2.0 * sigma ** 2)

    B = y_true.shape[0]
    yt = jnp.reshape(y_true, (B, -1)).astype(jnp.float32)
    yp = jnp.reshape(y_pred, (B, -1)).astype(jnp.float32)
    n_voxels = yt.shape[1]

    # ---------------- Generation-specific configuration ----------------
    kind = ""
    try:
        kind = jax.devices()[0].device_kind.lower()
    except Exception:
        pass
    is_v7 = ("v7" in kind) or ("tpu7" in kind) or ("7x" in kind)
    is_pre_v6 = any(("v%d" % i) in kind for i in (2, 3, 4, 5))
    if use_bf16 is None:
        # bf16 VPU / EUP / native MXU dtype only on v6e and v7x.
        use_bf16 = not is_pre_v6
    compute_dtype = jnp.bfloat16 if use_bf16 else jnp.float32

    if max_tile_voxels is None:
        if ("v2" in kind) or ("v3" in kind):
            max_tile_voxels = 8192              # tiny VMEM, stay small
        elif is_pre_v6:
            max_tile_voxels = 16384             # f32 slabs, 128 MiB physical VMEM
        elif is_v7 and not use_bf16:
            max_tile_voxels = 16384             # f32 slabs on 64 MiB VMEM
        else:
            max_tile_voxels = 32768             # bf16 slabs (v6e / v7x)
    if vmem_limit_bytes is None:
        if ("v2" in kind) or ("v3" in kind):
            vmem_limit_bytes = None             # keep compiler default
        elif "v6" in kind:
            vmem_limit_bytes = 64 * 1024 * 1024
        else:
            # v4/v5e (128 MiB physical) and v7x/unknown (64 MiB): 48 MiB keeps
            # double-buffer headroom.  Budget at TILE_N=32768 bf16: ~4 MiB of
            # 8x-sublane-padded input windows + <16 MiB of live slabs.
            vmem_limit_bytes = 48 * 1024 * 1024

    # v7x has two TensorCores; for B == 1 split the voxel reduction into two
    # "parallel" chunks so both cores get work (no effect on v5e / v6e).
    num_chunks = 2 if (is_v7 and B == 1) else 1

    # ---------------- Lane-dense voxel tiling (multiples of 128) --------
    target = min(max_tile_voxels, -(-n_voxels // num_chunks))
    tile_n = _round_up(max(target, 1), 128)
    n_pad = _round_up(n_voxels, tile_n * num_chunks)
    need_mask = n_pad != n_voxels
    if need_mask:
        yt = jnp.pad(yt, ((0, 0), (0, n_pad - n_voxels)))
        yp = jnp.pad(yp, ((0, 0), (0, n_pad - n_voxels)))
    n_tiles = n_pad // tile_n
    tiles_per_chunk = n_tiles // num_chunks
    yt = yt.reshape(B, n_tiles, 1, tile_n)
    yp = yp.reshape(B, n_tiles, 1, tile_n)

    kernel = functools.partial(
        _mi_pab_kernel, preterm=float(preterm), max_clip=float(maxval),
        minval=float(minval), bin_width=bin_width, num_bins=num_bins,
        n_valid=n_voxels, tile_n=tile_n, tiles_per_chunk=tiles_per_chunk,
        need_mask=need_mask, compute_dtype=compute_dtype)

    cp_kwargs = dict(dimension_semantics=("parallel", "parallel", "arbitrary"))
    if vmem_limit_bytes is not None:
        cp_kwargs["vmem_limit_bytes"] = int(vmem_limit_bytes)

    pab_partial = pl.pallas_call(
        kernel,
        out_shape=jax.ShapeDtypeStruct((B, num_chunks, num_bins, num_bins),
                                       jnp.float32),
        grid_spec=pltpu.PrefetchScalarGridSpec(
            num_scalar_prefetch=0,
            grid=(B, num_chunks, tiles_per_chunk),
            in_specs=[
                pl.BlockSpec((1, 1, 1, tile_n),
                             lambda b, c, n: (b, c * tiles_per_chunk + n, 0, 0)),
                pl.BlockSpec((1, 1, 1, tile_n),
                             lambda b, c, n: (b, c * tiles_per_chunk + n, 0, 0)),
            ],
            out_specs=pl.BlockSpec((1, 1, num_bins, num_bins),
                                   lambda b, c, n: (b, c, 0, 0))),
        compiler_params=pltpu.CompilerParams(**cp_kwargs),
    )(yt, yp)

    # ---------------- Tiny O(B * K^2) finalize in plain JAX -------------
    pab = jnp.sum(pab_partial, axis=1) / float(n_voxels)        # (B, K, K)
    # Each per-voxel soft-bin row sums to 1, so the marginals are exactly the
    # row / column sums of the joint histogram (holds for the fused-normalized
    # accumulation too, since padded voxels are zeroed via the weight).
    pa = jnp.sum(pab, axis=2, keepdims=True)                    # (B, K, 1)
    pb = jnp.sum(pab, axis=1, keepdims=True)                    # (B, 1, K)
    papb = pa * pb + 1e-6
    mi = jnp.sum(pab * jnp.log(pab / papb + 1e-6), axis=(1, 2))
    return -jnp.mean(mi)


def _reference_forward(y_true, y_pred, *, sigma_ratio=1.0,
                       minval=0.0, maxval=1.0, num_bins=32):
    """Plain-JAX reference mirroring the PyTorch code exactly (f32)."""
    bin_centers_np = np.linspace(minval, maxval, num=num_bins)
    sigma = float(np.mean(np.diff(bin_centers_np))) * sigma_ratio
    preterm = 1.0 / (2.0 * sigma ** 2)
    vbc = jnp.asarray(bin_centers_np, dtype=jnp.float32).reshape(1, 1, num_bins)

    yp = jnp.clip(y_pred, 0.0, maxval)
    yt = jnp.clip(y_true, 0.0, maxval)
    B = yt.shape[0]
    yt = yt.reshape(B, -1)[..., None]
    yp = yp.reshape(B, -1)[..., None]
    nb_voxels = yp.shape[1]

    I_a = jnp.exp(-preterm * jnp.square(yt - vbc))
    I_a = I_a / jnp.sum(I_a, axis=-1, keepdims=True)
    I_b = jnp.exp(-preterm * jnp.square(yp - vbc))
    I_b = I_b / jnp.sum(I_b, axis=-1, keepdims=True)

    hi = jax.lax.Precision.HIGHEST
    pab = jnp.einsum('bnk,bnl->bkl', I_a, I_b, precision=hi) / nb_voxels
    pa = jnp.mean(I_a, axis=1, keepdims=True)
    pb = jnp.mean(I_b, axis=1, keepdims=True)
    papb = jnp.einsum('bik,bil->bkl', pa, pb, precision=hi) + 1e-6
    mi = jnp.sum(pab * jnp.log(pab / papb + 1e-6), axis=(1, 2))
    return -jnp.mean(mi)


if __name__ == "__main__":
    key = jax.random.PRNGKey(0)
    k1, k2 = jax.random.split(key)
    # NCHW inputs like the PyTorch module would see: (B=2, C=4, H=16, W=16).
    y_true = jax.random.uniform(k1, (2, 4, 16, 16), dtype=jnp.float32)
    y_pred = jax.random.uniform(k2, (2, 4, 16, 16), dtype=jnp.float32)

    ref = _reference_forward(y_true, y_pred)

    # (1) f32 path: the tight correctness anchor on every TPU generation.
    out_f32 = jax.block_until_ready(
        mutual_information_forward(y_true, y_pred, use_bf16=False))
    np.testing.assert_allclose(np.asarray(out_f32), np.asarray(ref),
                               rtol=1e-4, atol=1e-5)

    # (2) Generation-default fast path (bf16 soft-binning on v6e/v7x, f32 on
    #     v5e and older).  bf16 rounding of the soft-bin weights perturbs the
    #     MI estimate at the ~1e-3 level, so this check is intentionally
    #     looser; the f32 run above is the exact-match anchor.
    out_auto = jax.block_until_ready(
        mutual_information_forward(y_true, y_pred))
    np.testing.assert_allclose(np.asarray(out_auto), np.asarray(ref),
                               rtol=5e-2, atol=5e-3)

    print("KERNEL_OK")
</pallas_src>

<mosaic_0001>
module attributes {stable_mosaic.version = 11 : i64} {
  func.func @_mi_pab_kernel(%arg0: i32, %arg1: i32, %arg2: i32, %arg3: memref<1x1x1x1024xf32, #tpu.memory_space<vmem>>, %arg4: memref<1x1x1x1024xf32, #tpu.memory_space<vmem>>, %arg5: memref<1x1x32x32xf32, #tpu.memory_space<vmem>>) attributes {dimension_semantics = [#tpu.dimension_semantics<parallel>, #tpu.dimension_semantics<parallel>, #tpu.dimension_semantics<arbitrary>], iteration_bounds = array<i64: 2, 1, 1>, scalar_prefetch = 0 : i64, scratch_operands = 0 : i64, tpu.core_type = #tpu.core_type<tc>, window_params = [{transform_indices = @transform_0, window_bounds = array<i64: 1, 1, 1, 1024>}, {transform_indices = @transform_1, window_bounds = array<i64: 1, 1, 1, 1024>}, {transform_indices = @transform_2, window_bounds = array<i64: 1, 1, 32, 32>}]} {
    %c0_i32 = arith.constant 0 : i32
    %0 = arith.cmpi eq, %arg2, %c0_i32 : i32
    %1 = arith.extui %0 : i1 to i32
    %c0_i32_0 = arith.constant 0 : i32
    %2 = arith.cmpi ne, %1, %c0_i32_0 : i32
    scf.if %2 {
      %cst_26 = arith.constant 0.000000e+00 : f32
      %48 = vector.broadcast %cst_26 : f32 to vector<1x1x32x32xf32>
      %c0_27 = arith.constant 0 : index
      %c0_28 = arith.constant 0 : index
      %c0_29 = arith.constant 0 : index
      %c0_30 = arith.constant 0 : index
      %49 = vector.load %arg5[%c0_27, %c0_28, %c0_29, %c0_30] : memref<1x1x32x32xf32, #tpu.memory_space<vmem>>, vector<1x1x32x32xf32>
      tpu.vector_store %arg5[%c0_27, %c0_28, %c0_29, %c0_30], %48 {strides = array<i32>} : memref<1x1x32x32xf32, #tpu.memory_space<vmem>>, vector<1x1x32x32xf32>,
    } else {
    }
    %3 = tpu.iota {dimensions = array<i32: 0>} : vector<32x1xi32>
    %4 = arith.sitofp %3 : vector<32x1xi32> to vector<32x1xf32>
    %cst = arith.constant 0.0322580636 : f32
    %5 = vector.broadcast %cst : f32 to vector<32x1xf32>
    %6 = arith.mulf %5, %4 : vector<32x1xf32>
    %cst_1 = arith.constant 0.000000e+00 : f32
    %7 = vector.broadcast %cst_1 : f32 to vector<32x1xf32>
    %8 = arith.addf %7, %6 : vector<32x1xf32>
    %c0 = arith.constant 0 : index
    %c0_2 = arith.constant 0 : index
    %c0_3 = arith.constant 0 : index
    %c0_4 = arith.constant 0 : index
    %9 = vector.load %arg3[%c0, %c0_2, %c0_3, %c0_4] : memref<1x1x1x1024xf32, #tpu.memory_space<vmem>>, vector<1x1x1x1024xf32>
    %10 = vector.shape_cast %9 : vector<1x1x1x1024xf32> to vector<1x1024xf32>
    %cst_5 = arith.constant 0.000000e+00 : f32
    %cst_6 = arith.constant 1.000000e+00 : f32
    %11 = vector.broadcast %cst_5 : f32 to vector<1x1024xf32>
    %12 = arith.maximumf %11, %10 : vector<1x1024xf32>
    %13 = vector.broadcast %cst_6 : f32 to vector<1x1024xf32>
    %14 = arith.minimumf %13, %12 : vector<1x1024xf32>
    %c0_7 = arith.constant 0 : index
    %c0_8 = arith.constant 0 : index
    %c0_9 = arith.constant 0 : index
    %c0_10 = arith.constant 0 : index
    %15 = vector.load %arg4[%c0_7, %c0_8, %c0_9, %c0_10] : memref<1x1x1x1024xf32, #tpu.memory_space<vmem>>, vector<1x1x1x1024xf32>
    %16 = vector.shape_cast %15 : vector<1x1x1x1024xf32> to vector<1x1024xf32>
    %cst_11 = arith.constant 0.000000e+00 : f32
    %cst_12 = arith.constant 1.000000e+00 : f32
    %17 = vector.broadcast %cst_11 : f32 to vector<1x1024xf32>
    %18 = arith.maximumf %17, %16 : vector<1x1024xf32>
    %19 = vector.broadcast %cst_12 : f32 to vector<1x1024xf32>
    %20 = arith.minimumf %19, %18 : vector<1x1024xf32>
    %21 = vector.broadcast %14 : vector<1x1024xf32> to vector<32x1024xf32>
    %22 = vector.broadcast %8 : vector<32x1xf32> to vector<32x1024xf32>
    %23 = arith.subf %21, %22 : vector<32x1024xf32>
    %cst_13 = arith.constant -4.805000e+02 : f32
    %24 = vector.broadcast %cst_13 : f32 to vector<32x1024xf32>
    %25 = arith.mulf %24, %23 : vector<32x1024xf32>
    %26 = arith.mulf %25, %23 : vector<32x1024xf32>
    %27 = math.exp %26 : vector<32x1024xf32>
    %28 = vector.broadcast %20 : vector<1x1024xf32> to vector<32x1024xf32>
    %29 = vector.broadcast %8 : vector<32x1xf32> to vector<32x1024xf32>
    %30 = arith.subf %28, %29 : vector<32x1024xf32>
    %cst_14 = arith.constant -4.805000e+02 : f32
    %31 = vector.broadcast %cst_14 : f32 to vector<32x1024xf32>
    %32 = arith.mulf %31, %30 : vector<32x1024xf32>
    %33 = arith.mulf %32, %30 : vector<32x1024xf32>
    %34 = math.exp %33 : vector<32x1024xf32>
    %cst_15 = arith.constant dense<0.000000e+00> : vector<1024xf32>
    %35 = vector.multi_reduction <add>, %27, %cst_15 [0] : vector<32x1024xf32> to vector<1024xf32>
    %36 = vector.shape_cast %35 : vector<1024xf32> to vector<1x1024xf32>
    %cst_16 = arith.constant dense<0.000000e+00> : vector<1024xf32>
    %37 = vector.multi_reduction <add>, %34, %cst_16 [0] : vector<32x1024xf32> to vector<1024xf32>
    %38 = vector.shape_cast %37 : vector<1024xf32> to vector<1x1024xf32>
    %39 = arith.mulf %36, %38 : vector<1x1024xf32>
    %40 = tpu.reciprocal %39 : vector<1x1024xf32> -> vector<1x1024xf32>
    %41 = vector.broadcast %40 : vector<1x1024xf32> to vector<32x1024xf32>
    %42 = arith.mulf %27, %41 : vector<32x1024xf32>
    %cst_17 = arith.constant dense<0.000000e+00> : vector<32x32xf32>
    %43 = tpu.matmul %42, %34, %cst_17 {dimension_numbers = #tpu.dot_dimension_numbers<[1], [1], [0], [0], [0, 0, 1, 0], [], []>} : vector<32x1024xf32>, vector<32x1024xf32>, vector<32x32xf32> -> vector<32x32xf32>
    %c0_18 = arith.constant 0 : index
    %c0_19 = arith.constant 0 : index
    %c0_20 = arith.constant 0 : index
    %c0_21 = arith.constant 0 : index
    %44 = vector.load %arg5[%c0_18, %c0_19, %c0_20, %c0_21] : memref<1x1x32x32xf32, #tpu.memory_space<vmem>>, vector<1x1x32x32xf32>
    %45 = vector.shape_cast %43 : vector<32x32xf32> to vector<1x1x32x32xf32>
    %46 = arith.addf %44, %45 : vector<1x1x32x32xf32>
    %c0_22 = arith.constant 0 : index
    %c0_23 = arith.constant 0 : index
    %c0_24 = arith.constant 0 : index
    %c0_25 = arith.constant 0 : index
    %47 = vector.load %arg5[%c0_22, %c0_23, %c0_24, %c0_25] : memref<1x1x32x32xf32, #tpu.memory_space<vmem>>, vector<1x1x32x32xf32>
    tpu.vector_store %arg5[%c0_22, %c0_23, %c0_24, %c0_25], %46 {strides = array<i32>} : memref<1x1x32x32xf32, #tpu.memory_space<vmem>>, vector<1x1x32x32xf32>,
    return
  }
  func.func @transform_0(%arg0: i32, %arg1: i32, %arg2: i32) -> (i32, i32, i32, i32) {
    %c1_i32 = arith.constant 1 : i32
    %0 = arith.muli %arg1, %c1_i32 : i32
    %1 = arith.addi %0, %arg2 : i32
    %c0_i32 = arith.constant 0 : i32
    %c0_i32_0 = arith.constant 0 : i32
    %c0_i32_1 = arith.constant 0 : i32
    return %arg0, %1, %c0_i32, %c0_i32_0 : i32, i32, i32, i32
  }
  func.func @transform_1(%arg0: i32, %arg1: i32, %arg2: i32) -> (i32, i32, i32, i32) {
    %c1_i32 = arith.constant 1 : i32
    %0 = arith.muli %arg1, %c1_i32 : i32
    %1 = arith.addi %0, %arg2 : i32
    %c0_i32 = arith.constant 0 : i32
    %c0_i32_0 = arith.constant 0 : i32
    %c0_i32_1 = arith.constant 0 : i32
    return %arg0, %1, %c0_i32, %c0_i32_0 : i32, i32, i32, i32
  }
  func.func @transform_2(%arg0: i32, %arg1: i32, %arg2: i32) -> (i32, i32, i32, i32) {
    %c0_i32 = arith.constant 0 : i32
    %c0_i32_0 = arith.constant 0 : i32
    %c0_i32_1 = arith.constant 0 : i32
    return %arg0, %arg1, %c0_i32, %c0_i32_0 : i32, i32, i32, i32
  }
}

</mosaic_0001>

<llo_original>
// kernel: tpu_custom_call.1
$region0: #{tpu_custom_call.1}
  #allocation0 [shape = 'u32[]', space=smem, size = 0x4, offset = 0x4, fixed_abs, tag = 'smem constant byte address 0x4 - core index']
  #allocation1 [shape = 'u32[144,128]{1,0:T(1,128)}', space=vmem, size = 0x12000, scoped, tag = 'internal scratch']
  %s0 = inlined_call_operand.hbm [shape: f32[2,1,1,1024], index: 0, kind: input, shape index: {}]
  %s1 = inlined_call_operand.hbm [shape: f32[2,1,1,1024], index: 1, kind: input, shape index: {}]
  %s2 = inlined_call_operand.hbm [shape: f32[2,1,32,32], index: 2, kind: output, shape index: {}]
  %s3 = sld [smem:[#allocation0]]
  $region53: #{tpu_custom_call.1} parent=0
    _
  %s5 = ssub.s32 1, %s3
  %s6 = scalar_select 0, %s5, %s3
  $region1: #{tpu_custom_call.1} parent=0
    #allocation2 [shape = 'u8[8192]{0}', space=vmem, size = 0x2000, scoped, tag = 'input window, operand 0']
    #allocation3 [shape = 's32[2]{0}', space=sflag, size = 0x8, scoped, tag = 'scoped memory for tpu_custom_call.1']
    #allocation4 [shape = 's32[2]{0}', space=sflag, size = 0x8, scoped, tag = 'scoped memory for tpu_custom_call.1']
    #allocation5 [shape = 'u8[8192]{0}', space=vmem, size = 0x2000, scoped, tag = 'input window, operand 1']
    #allocation6 [shape = 's32[2]{0}', space=sflag, size = 0x8, scoped, tag = 'scoped memory for tpu_custom_call.1']
    #allocation7 [shape = 'u8[32768]{0}', space=vmem, size = 0x8000, scoped, tag = 'output window, operand 0']
    %7 = vsyncpa [#allocation3], 0
    %s8 = scalar_lea.sflag [#allocation3], 1
    %9 = vsyncpa %s8, 0
    %10 = vsyncpa [#allocation6], 0
    %s11 = scalar_lea.sflag [#allocation6], 1
    %12 = vsyncpa %s11, 0
    %13 = vsyncpa [#allocation4], 0
    %s14 = scalar_lea.sflag [#allocation4], 1
    %15 = vsyncpa %s14, 0
    loop: start=0, step=1, limit=4
    $region2: #{tpu_custom_call.1} parent=1 // loop_pre_header
      _
    $region3: #{tpu_custom_call.1} parent=1 // loop_header
      %s17 = sphi 0, %s21
      %p18 = scmp.ge.s32.totalorder %s17, 4
      %s24 = sphi 0, %s43
      %s25 = sphi 0, %s39
      %s26 = sphi 0, %s35
      %s27 = sphi 0, %s24
      %s28 = sphi 0, %s25
      %s29 = sphi 0, %s26
      %s30 = sphi 0, %s27
      %s31 = sphi 0, %s28
      %s32 = sphi 0, %s29
      %s50 = sphi 0, %s52
      %s53 = sphi 0, %s50
      %s54 = sphi 0, %s53
      %s70 = sphi 0, %s54
      %s80 = sphi 0, %s82
      %s83 = sphi 0, %s80
      %s84 = sphi 0, %s83
      %s100 = sphi 0, %s84
      %s108 = sphi 0, %s110
      %s111 = sphi 0, %s108
      %s112 = sphi 0, %s111
      %s128 = sphi 0, %s112
    $region4: #{tpu_custom_call.1} parent=1 // loop_header_branch
      %20 = sbr.rel (%p18) target = $region8
    $region5: #{tpu_custom_call.1} parent=1 // loop_body
      %s22 = ssub.s32 %s17, 1
      %s23 = ssub.s32 %s17, 2
      %s33 = sadd.s32 1, %s26
      %p34 = scmp.ge.s32.totalorder %s33, 1
      %s35 = scalar_select %p34, 0, %s33
      %s36 = sadd.s32 1, %s25
      %s37 = scalar_select %p34, %s36, %s25
      %p38 = scmp.ge.s32.totalorder %s37, 1
      %s39 = scalar_select %p38, 0, %s37
      %s40 = sadd.s32 1, %s24
      %s41 = scalar_select %p38, %s40, %s24
      %p42 = scmp.ge.s32.totalorder %s41, 2
      %s43 = scalar_select %p42, 0, %s41
      %s44 = sadd.s32 %s25, %s26
      %s45 = sadd.s32 %s39, %s35
      %s46 = ssub.s32 %s24, %s43
      %s47 = ssub.s32 %s44, %s45
      %s48 = sor.u32 %s46, %s47
      %p49 = scmp.eq.s32.totalorder %s48, 0
      %s51 = sadd.s32 %s50, 1
      %s52 = scalar_select %p49, %s50, %s51
      %p55 = pneg %p49
      %p56 = scmp.eq.s32.totalorder %s17, 1
      %p57 = por %p55, %p56
      %p58 = scmp.ne.s32.totalorder %s50, %s53
      %p59 = scmp.eq.s32.totalorder %s17, 0
      %p60 = por %p58, %p59
      %p61 = scmp.ne.s32.totalorder %s50, %s53
      %p62 = scmp.eq.s32.totalorder %s22, 1
      %p63 = por %p61, %p62
      %p64 = scmp.ne.s32.totalorder %s53, %s54
      %p65 = scmp.eq.s32.totalorder %s22, 0
      %p66 = por %p64, %p65
      %p67 = scmp.ne.s32.totalorder %s53, %s54
      %p68 = scmp.eq.s32.totalorder %s23, 1
      %p69 = por %p67, %p68
      %p71 = scmp.ne.s32.totalorder %s54, %s70
      %p72 = scmp.eq.s32.totalorder %s23, 0
      %p73 = por %p71, %p72
      %s74 = sadd.s32 %s25, %s26
      %s75 = sadd.s32 %s39, %s35
      %s76 = ssub.s32 %s24, %s43
      %s77 = ssub.s32 %s74, %s75
      %s78 = sor.u32 %s76, %s77
      %p79 = scmp.eq.s32.totalorder %s78, 0
      %s81 = sadd.s32 %s80, 1
      %s82 = scalar_select %p79, %s80, %s81
      %p85 = pneg %p79
      %p86 = scmp.eq.s32.totalorder %s17, 1
      %p87 = por %p85, %p86
      %p88 = scmp.ne.s32.totalorder %s80, %s83
      %p89 = scmp.eq.s32.totalorder %s17, 0
      %p90 = por %p88, %p89
      %p91 = scmp.ne.s32.totalorder %s80, %s83
      %p92 = scmp.eq.s32.totalorder %s22, 1
      %p93 = por %p91, %p92
      %p94 = scmp.ne.s32.totalorder %s83, %s84
      %p95 = scmp.eq.s32.totalorder %s22, 0
      %p96 = por %p94, %p95
      %p97 = scmp.ne.s32.totalorder %s83, %s84
      %p98 = scmp.eq.s32.totalorder %s23, 1
      %p99 = por %p97, %p98
      %p101 = scmp.ne.s32.totalorder %s84, %s100
      %p102 = scmp.eq.s32.totalorder %s23, 0
      %p103 = por %p101, %p102
      %s104 = ssub.s32 %s24, %s43
      %s105 = ssub.s32 %s25, %s39
      %s106 = sor.u32 %s104, %s105
      %p107 = scmp.eq.s32.totalorder %s106, 0
      %s109 = sadd.s32 %s108, 1
      %s110 = scalar_select %p107, %s108, %s109
      %p113 = pneg %p107
      %p114 = scmp.eq.s32.totalorder %s17, 1
      %p115 = por %p113, %p114
      %p116 = scmp.ne.s32.totalorder %s108, %s111
      %p117 = scmp.eq.s32.totalorder %s17, 0
      %p118 = por %p116, %p117
      %p119 = scmp.ne.s32.totalorder %s108, %s111
      %p120 = scmp.eq.s32.totalorder %s22, 1
      %p121 = por %p119, %p120
      %p122 = scmp.ne.s32.totalorder %s111, %s112
      %p123 = scmp.eq.s32.totalorder %s22, 0
      %p124 = por %p122, %p123
      %p125 = scmp.ne.s32.totalorder %s111, %s112
      %p126 = scmp.eq.s32.totalorder %s23, 1
      %p127 = por %p125, %p126
      %p129 = scmp.ne.s32.totalorder %s112, %s128
      %p130 = scmp.eq.s32.totalorder %s23, 0
      %p131 = por %p129, %p130
      %p132 = scmp.le.s32.totalorder 1, %s17
      %p133 = scmp.lt.s32.totalorder %s17, 3
      %p134 = pnand %p132, %p133
      %p135 = pneg %p134
      // Predicated region
      $region9: #{tpu_custom_call.1} parent=5 // pred_check
        _
      $region10: #{tpu_custom_call.1} parent=5 // pred_check_branch
        %137 = sbr.rel (%p134) target = $region12
      $region11: #{tpu_custom_call.1} parent=5 // pred_region
        %s138 = ssub.s32 %s17, 1
      $region12: #{tpu_custom_call.1} parent=5 // pred_fallthru
        _
      %p139 = scmp.lt.s32.totalorder %s17, 2
      // Predicated region
      $region13: #{tpu_custom_call.1} parent=5 // pred_check
        %p140 = pneg %p139
      $region14: #{tpu_custom_call.1} parent=5 // pred_check_branch
        %142 = sbr.rel (%p140) target = $region16
      $region15: #{tpu_custom_call.1} parent=5 // pred_region
        // Predicated region
        $region17: #{tpu_custom_call.1} parent=15 // pred_check
          %p143 = pneg %p60
        $region18: #{tpu_custom_call.1} parent=15 // pred_check_branch
          %145 = sbr.rel (%p143) target = $region20
        $region19: #{tpu_custom_call.1} parent=15 // pred_region
          %s146 = sand.u32 %s50, 1
          %s147 = scalar_lea.sflag [#allocation3], %s146
          %s148 = sand.u32 %s50, 1
          %s149 = smul.addr %s148, 8
          %s150 = scalar_lea.vmem [#allocation2], %s149
          %s151 = sadd.s32 %s25, %s26
          %s153 = ssub.s32 128, 128
          %154 = vsyncadd %s147, %s153
          %s155 = smul.addr %s151, 8
          %s156 = smul.addr %s24, 8
          %s157 = sadd.s32 %s155, %s156
          %s158 = smul.addr %s157, 16
          %s159 = scalar_lea.hbm %s0, %s158
          %s161 = sshll.u32 %s150, 4
          %s162 = int_to_ptr.vmem [resolvable:$true] %s161
          %164 = dma.hbm_to_vmem [thread:$0]  %s159, 128, %s162, %s147
        $region20: #{tpu_custom_call.1} parent=15 // pred_fallthru
          _
        // Predicated region
        $region21: #{tpu_custom_call.1} parent=15 // pred_check
          %p165 = pneg %p90
        $region22: #{tpu_custom_call.1} parent=15 // pred_check_branch
          %167 = sbr.rel (%p165) target = $region24
        $region23: #{tpu_custom_call.1} parent=15 // pred_region
          %s168 = sand.u32 %s80, 1
          %s169 = scalar_lea.sflag [#allocation6], %s168
          %s170 = sand.u32 %s80, 1
          %s171 = smul.addr %s170, 8
          %s172 = scalar_lea.vmem [#allocation5], %s171
          %s173 = sadd.s32 %s25, %s26
          %s175 = ssub.s32 128, 128
          %176 = vsyncadd %s169, %s175
          %s177 = smul.addr %s173, 8
          %s178 = smul.addr %s24, 8
          %s179 = sadd.s32 %s177, %s178
          %s180 = smul.addr %s179, 16
          %s181 = scalar_lea.hbm %s1, %s180
          %s183 = sshll.u32 %s172, 4
          %s184 = int_to_ptr.vmem [resolvable:$true] %s183
          %186 = dma.hbm_to_vmem [thread:$0]  %s181, 128, %s184, %s169
        $region24: #{tpu_custom_call.1} parent=15 // pred_fallthru
          _
      $region16: #{tpu_custom_call.1} parent=5 // pred_fallthru
        _
      %p187 = scmp.le.s32.totalorder 1, %s17
      %p188 = scmp.lt.s32.totalorder %s17, 3
      %p189 = pnand %p187, %p188
      %p190 = pneg %p189
      // Predicated region
      $region25: #{tpu_custom_call.1} parent=5 // pred_check
        _
      $region26: #{tpu_custom_call.1} parent=5 // pred_check_branch
        %192 = sbr.rel (%p189) target = $region28
      $region27: #{tpu_custom_call.1} parent=5 // pred_region
        %s193 = ssub.s32 %s17, 1
        %s194 = sand.u32 %s53, 1
        %s195 = scalar_lea.sflag [#allocation3], %s194
        %s196 = sand.u32 %s53, 1
        %s197 = smul.addr %s196, 8
        %s198 = scalar_lea.vmem [#allocation2], %s197
        // Predicated region
        $region29: #{tpu_custom_call.1} parent=27 // pred_check
          %p199 = pneg %p66
        $region30: #{tpu_custom_call.1} parent=27 // pred_check_branch
          %201 = sbr.rel (%p199) target = $region32
        $region31: #{tpu_custom_call.1} parent=27 // pred_region
          %202 = dma.done %s195, 128
        $region32: #{tpu_custom_call.1} parent=27 // pred_fallthru
          _
        %s203 = sand.u32 %s83, 1
        %s204 = scalar_lea.sflag [#allocation6], %s203
        %s205 = sand.u32 %s83, 1
        %s206 = smul.addr %s205, 8
        %s207 = scalar_lea.vmem [#allocation5], %s206
        // Predicated region
        $region33: #{tpu_custom_call.1} parent=27 // pred_check
          %p208 = pneg %p96
        $region34: #{tpu_custom_call.1} parent=27 // pred_check_branch
          %210 = sbr.rel (%p208) target = $region36
        $region35: #{tpu_custom_call.1} parent=27 // pred_region
          %211 = dma.done %s204, 128
        $region36: #{tpu_custom_call.1} parent=27 // pred_fallthru
          _
        %s212 = sand.u32 %s53, 1
        %s213 = scalar_lea.sflag [#allocation3], %s212
        %s214 = sand.u32 %s53, 1
        %s215 = smul.addr %s214, 8
        %s216 = scalar_lea.vmem [#allocation2], %s215
        %p217 = pneg %p66
        %p218 = pneg %p63
        %s219 = sand.u32 %s83, 1
        %s220 = scalar_lea.sflag [#allocation6], %s219
        %s221 = sand.u32 %s83, 1
        %s222 = smul.addr %s221, 8
        %s223 = scalar_lea.vmem [#allocation5], %s222
        %p224 = pneg %p96
        %p225 = pneg %p93
        %p226 = pneg %p124
        %p227 = pneg %p121
        %s228 = sand.u32 %s111, 1
        %s229 = scalar_lea.sflag [#allocation4], %s228
        %s230 = sand.u32 %s111, 1
        %s231 = smul.addr %s230, 32
        %s232 = scalar_lea.vmem [#allocation7], %s231
        %s233 = sadd.s32 %s28, %s29
        %s234 = sadd.s32 %s28, %s29
        %p235 = scmp.eq.s32.totalorder %s29, 0
        // Predicated region
        $region37: #{tpu_custom_call.1} parent=27 // pred_check
          %p236 = pneg %p235
        $region38: #{tpu_custom_call.1} parent=27 // pred_check_branch
          %238 = sbr.rel (%p236) target = $region40
        $region39: #{tpu_custom_call.1} parent=27 // pred_region
          %vm239 = vcmask 261120
          %240 = vst.msk [vmem:[%s232] sm:$0xff] %vm239, 0.0
          %241 = vst.msk [vmem:[%s232 + $0x8] sm:$0xff] %vm239, 0.0
          %242 = vst.msk [vmem:[%s232 + $0x10] sm:$0xff] %vm239, 0.0
          %243 = vst.msk [vmem:[%s232 + $0x18] sm:$0xff] %vm239, 0.0
        $region40: #{tpu_custom_call.1} parent=27 // pred_fallthru
          _
        %v244 = vlaneseq
        %v245 = vshrl.u32 %v244, 7
        %v246 = vadd.s32 %v245, 8
        %v247 = vadd.s32 %v245, 16
        %v248 = vadd.s32 %v245, 24
        %v249 = vcvt.s32.f32 %v245
        %v250 = vcvt.s32.f32 %v246
        %v251 = vcvt.s32.f32 %v247
        %v252 = vcvt.s32.f32 %v248
        %v253 = vmul.f32 %v249, 0.032258064
        %v254 = vmul.f32 %v250, 0.032258064
        %v255 = vmul.f32 %v251, 0.032258064
        %v256 = vmul.f32 %v252, 0.032258064
        %v257 = vadd.f32 %v253, 0.0
        %v258 = vadd.f32 %v254, 0.0
        %v259 = vadd.f32 %v255, 0.0
        %v260 = vadd.f32 %v256, 0.0
        %v261 = vld [vmem:[%s198] sm:$0xff]
        %v262 = vmax.f32 %v261, 0.0
        %v263 = vmin.f32 %v262, 1.0
        %v264 = vld [vmem:[%s207] sm:$0xff]
        %v265 = vmax.f32 %v264, 0.0
        %v266 = vmin.f32 %v265, 1.0
        %v268 = vlaneseq
        %v269 = vshrl.u32 %v268, 7
        %v270 = vsub.s32 0, %v269
        %v271 = vrot.slane %v263, %v270
        %v272 = vlaneseq
        %v273 = vshrl.u32 %v272, 7
        %v274 = vsub.s32 1, %v273
        %v275 = vrot.slane %v263, %v274
        %v276 = vlaneseq
        %v277 = vshrl.u32 %v276, 7
        %v278 = vsub.s32 2, %v277
        %v279 = vrot.slane %v263, %v278
        %v280 = vlaneseq
        %v281 = vshrl.u32 %v280, 7
        %v282 = vsub.s32 3, %v281
        %v283 = vrot.slane %v263, %v282
        %v284 = vlaneseq
        %v285 = vshrl.u32 %v284, 7
        %v286 = vsub.s32 4, %v285
        %v287 = vrot.slane %v263, %v286
        %v288 = vlaneseq
        %v289 = vshrl.u32 %v288, 7
        %v290 = vsub.s32 5, %v289
        %v291 = vrot.slane %v263, %v290
        %v292 = vlaneseq
        %v293 = vshrl.u32 %v292, 7
        %v294 = vsub.s32 6, %v293
        %v295 = vrot.slane %v263, %v294
        %v296 = vlaneseq
        %v297 = vshrl.u32 %v296, 7
        %v298 = vsub.s32 7, %v297
        %v299 = vrot.slane %v263, %v298
        %v308 = vsub.f32 %v271, %v257
        %v309 = vsub.f32 %v275, %v257
        %v310 = vsub.f32 %v279, %v257
        %v311 = vsub.f32 %v283, %v257
        %v312 = vsub.f32 %v287, %v257
        %v313 = vsub.f32 %v291, %v257
        %v314 = vsub.f32 %v295, %v257
        %v315 = vsub.f32 %v299, %v257
        %v316 = vsub.f32 %v271, %v258
        %v317 = vsub.f32 %v275, %v258
        %v318 = vsub.f32 %v279, %v258
        %v319 = vsub.f32 %v283, %v258
        %v320 = vsub.f32 %v287, %v258
        %v321 = vsub.f32 %v291, %v258
        %v322 = vsub.f32 %v295, %v258
        %v323 = vsub.f32 %v299, %v258
        %v324 = vsub.f32 %v271, %v259
        %v325 = vsub.f32 %v275, %v259
        %v326 = vsub.f32 %v279, %v259
        %v327 = vsub.f32 %v283, %v259
        %v328 = vsub.f32 %v287, %v259
        %v329 = vsub.f32 %v291, %v259
        %v330 = vsub.f32 %v295, %v259
        %v331 = vsub.f32 %v299, %v259
        %v332 = vsub.f32 %v271, %v260
        %v333 = vsub.f32 %v275, %v260
        %v334 = vsub.f32 %v279, %v260
        %v335 = vsub.f32 %v283, %v260
        %v336 = vsub.f32 %v287, %v260
        %v337 = vsub.f32 %v291, %v260
        %v338 = vsub.f32 %v295, %v260
        %v339 = vsub.f32 %v299, %v260
        %v340 = vmul.f32 %v308, -480.5
        %v341 = vmul.f32 %v309, -480.5
        %v342 = vmul.f32 %v310, -480.5
        %v343 = vmul.f32 %v311, -480.5
        %v344 = vmul.f32 %v312, -480.5
        %v345 = vmul.f32 %v313, -480.5
        %v346 = vmul.f32 %v314, -480.5
        %v347 = vmul.f32 %v315, -480.5
        %v348 = vmul.f32 %v316, -480.5
        %v349 = vmul.f32 %v317, -480.5
        %v350 = vmul.f32 %v318, -480.5
        %v351 = vmul.f32 %v319, -480.5
        %v352 = vmul.f32 %v320, -480.5
        %v353 = vmul.f32 %v321, -480.5
        %v354 = vmul.f32 %v322, -480.5
        %v355 = vmul.f32 %v323, -480.5
        %v356 = vmul.f32 %v324, -480.5
        %v357 = vmul.f32 %v325, -480.5
        %v358 = vmul.f32 %v326, -480.5
        %v359 = vmul.f32 %v327, -480.5
        %v360 = vmul.f32 %v328, -480.5
        %v361 = vmul.f32 %v329, -480.5
        %v362 = vmul.f32 %v330, -480.5
        %v363 = vmul.f32 %v331, -480.5
        %v364 = vmul.f32 %v332, -480.5
        %v365 = vmul.f32 %v333, -480.5
        %v366 = vmul.f32 %v334, -480.5
        %v367 = vmul.f32 %v335, -480.5
        %v368 = vmul.f32 %v336, -480.5
        %v369 = vmul.f32 %v337, -480.5
        %v370 = vmul.f32 %v338, -480.5
        %v371 = vmul.f32 %v339, -480.5
        %v372 = vmul.f32 %v340, %v308
        %v373 = vmul.f32 %v341, %v309
        %v374 = vmul.f32 %v342, %v310
        %v375 = vmul.f32 %v343, %v311
        %v376 = vmul.f32 %v344, %v312
        %v377 = vmul.f32 %v345, %v313
        %v378 = vmul.f32 %v346, %v314
        %v379 = vmul.f32 %v347, %v315
        %v380 = vmul.f32 %v348, %v316
        %v381 = vmul.f32 %v349, %v317
        %v382 = vmul.f32 %v350, %v318
        %v383 = vmul.f32 %v351, %v319
        %v384 = vmul.f32 %v352, %v320
        %v385 = vmul.f32 %v353, %v321
        %v386 = vmul.f32 %v354, %v322
        %v387 = vmul.f32 %v355, %v323
        %v388 = vmul.f32 %v356, %v324
        %v389 = vmul.f32 %v357, %v325
        %v390 = vmul.f32 %v358, %v326
        %v391 = vmul.f32 %v359, %v327
        %v392 = vmul.f32 %v360, %v328
        %v393 = vmul.f32 %v361, %v329
        %v394 = vmul.f32 %v362, %v330
        %v395 = vmul.f32 %v363, %v331
        %v396 = vmul.f32 %v364, %v332
        %v397 = vmul.f32 %v365, %v333
        %v398 = vmul.f32 %v366, %v334
        %v399 = vmul.f32 %v367, %v335
        %v400 = vmul.f32 %v368, %v336
        %v401 = vmul.f32 %v369, %v337
        %v402 = vmul.f32 %v370, %v338
        %v403 = vmul.f32 %v371, %v339
        %v404 = vmul.f32 %v372, 1.442695
        %v405 = vpow.pop %v404
        %v406 = vmul.f32 %v373, 1.442695
        %v407 = vpow.pop %v406
        %v408 = vmul.f32 %v374, 1.442695
        %v409 = vpow.pop %v408
        %v410 = vmul.f32 %v375, 1.442695
        %v411 = vpow.pop %v410
        %v412 = vmul.f32 %v376, 1.442695
        %v413 = vpow.pop %v412
        %v414 = vmul.f32 %v377, 1.442695
        %v415 = vpow.pop %v414
        %v416 = vmul.f32 %v378, 1.442695
        %v417 = vpow.pop %v416
        %v418 = vmul.f32 %v379, 1.442695
        %v419 = vpow.pop %v418
        %v420 = vmul.f32 %v380, 1.442695
        %v421 = vpow.pop %v420
        %v422 = vmul.f32 %v381, 1.442695
        %v423 = vpow.pop %v422
        %v424 = vmul.f32 %v382, 1.442695
        %v425 = vpow.pop %v424
        %v426 = vmul.f32 %v383, 1.442695
        %v427 = vpow.pop %v426
        %v428 = vmul.f32 %v384, 1.442695
        %v429 = vpow.pop %v428
        %v430 = vmul.f32 %v385, 1.442695
        %v431 = vpow.pop %v430
        %v432 = vmul.f32 %v386, 1.442695
        %v433 = vpow.pop %v432
        %v434 = vmul.f32 %v387, 1.442695
        %v435 = vpow.pop %v434
        %v436 = vmul.f32 %v388, 1.442695
        %v437 = vpow.pop %v436
        %v438 = vmul.f32 %v389, 1.442695
        %v439 = vpow.pop %v438
        %v440 = vmul.f32 %v390, 1.442695
        %v441 = vpow.pop %v440
        %v442 = vmul.f32 %v391, 1.442695
        %v443 = vpow.pop %v442
        %v444 = vmul.f32 %v392, 1.442695
        %v445 = vpow.pop %v444
        %v446 = vmul.f32 %v393, 1.442695
        %v447 = vpow.pop %v446
        %v448 = vmul.f32 %v394, 1.442695
        %v449 = vpow.pop %v448
        %v450 = vmul.f32 %v395, 1.442695
        %v451 = vpow.pop %v450
        %v452 = vmul.f32 %v396, 1.442695
        %v453 = vpow.pop %v452
        %v454 = vmul.f32 %v397, 1.442695
        %v455 = vpow.pop %v454
        %v456 = vmul.f32 %v398, 1.442695
        %v457 = vpow.pop %v456
        %v458 = vmul.f32 %v399, 1.442695
        %v459 = vpow.pop %v458
        %v460 = vmul.f32 %v400, 1.442695
        %v461 = vpow.pop %v460
        %v462 = vmul.f32 %v401, 1.442695
        %v463 = vpow.pop %v462
        %v464 = vmul.f32 %v402, 1.442695
        %v465 = vpow.pop %v464
        %v466 = vmul.f32 %v403, 1.442695
        %v467 = vpow.pop %v466
        %v469 = vlaneseq
        %v470 = vshrl.u32 %v469, 7
        %v471 = vsub.s32 0, %v470
        %v472 = vrot.slane %v266, %v471
        %v473 = vlaneseq
        %v474 = vshrl.u32 %v473, 7
        %v475 = vsub.s32 1, %v474
        %v476 = vrot.slane %v266, %v475
        %v477 = vlaneseq
        %v478 = vshrl.u32 %v477, 7
        %v479 = vsub.s32 2, %v478
        %v480 = vrot.slane %v266, %v479
        %v481 = vlaneseq
        %v482 = vshrl.u32 %v481, 7
        %v483 = vsub.s32 3, %v482
        %v484 = vrot.slane %v266, %v483
        %v485 = vlaneseq
        %v486 = vshrl.u32 %v485, 7
        %v487 = vsub.s32 4, %v486
        %v488 = vrot.slane %v266, %v487
        %v489 = vlaneseq
        %v490 = vshrl.u32 %v489, 7
        %v491 = vsub.s32 5, %v490
        %v492 = vrot.slane %v266, %v491
        %v493 = vlaneseq
        %v494 = vshrl.u32 %v493, 7
        %v495 = vsub.s32 6, %v494
        %v496 = vrot.slane %v266, %v495
        %v497 = vlaneseq
        %v498 = vshrl.u32 %v497, 7
        %v499 = vsub.s32 7, %v498
        %v500 = vrot.slane %v266, %v499
        %v509 = vsub.f32 %v472, %v257
        %v510 = vsub.f32 %v476, %v257
        %v511 = vsub.f32 %v480, %v257
        %v512 = vsub.f32 %v484, %v257
        %v513 = vsub.f32 %v488, %v257
        %v514 = vsub.f32 %v492, %v257
        %v515 = vsub.f32 %v496, %v257
        %v516 = vsub.f32 %v500, %v257
        %v517 = vsub.f32 %v472, %v258
        %v518 = vsub.f32 %v476, %v258
        %v519 = vsub.f32 %v480, %v258
        %v520 = vsub.f32 %v484, %v258
        %v521 = vsub.f32 %v488, %v258
        %v522 = vsub.f32 %v492, %v258
        %v523 = vsub.f32 %v496, %v258
        %v524 = vsub.f32 %v500, %v258
        %v525 = vsub.f32 %v472, %v259
        %v526 = vsub.f32 %v476, %v259
        %v527 = vsub.f32 %v480, %v259
        %v528 = vsub.f32 %v484, %v259
        %v529 = vsub.f32 %v488, %v259
        %v530 = vsub.f32 %v492, %v259
        %v531 = vsub.f32 %v496, %v259
        %v532 = vsub.f32 %v500, %v259
        %v533 = vsub.f32 %v472, %v260
        %v534 = vsub.f32 %v476, %v260
        %v535 = vsub.f32 %v480, %v260
        %v536 = vsub.f32 %v484, %v260
        %v537 = vsub.f32 %v488, %v260
        %v538 = vsub.f32 %v492, %v260
        %v539 = vsub.f32 %v496, %v260
        %v540 = vsub.f32 %v500, %v260
        %v541 = vmul.f32 %v509, -480.5
        %v542 = vmul.f32 %v510, -480.5
        %v543 = vmul.f32 %v511, -480.5
        %v544 = vmul.f32 %v512, -480.5
        %v545 = vmul.f32 %v513, -480.5
        %v546 = vmul.f32 %v514, -480.5
        %v547 = vmul.f32 %v515, -480.5
        %v548 = vmul.f32 %v516, -480.5
        %v549 = vmul.f32 %v517, -480.5
        %v550 = vmul.f32 %v518, -480.5
        %v551 = vmul.f32 %v519, -480.5
        %v552 = vmul.f32 %v520, -480.5
        %v553 = vmul.f32 %v521, -480.5
        %v554 = vmul.f32 %v522, -480.5
        %v555 = vmul.f32 %v523, -480.5
        %v556 = vmul.f32 %v524, -480.5
        %v557 = vmul.f32 %v525, -480.5
        %v558 = vmul.f32 %v526, -480.5
        %v559 = vmul.f32 %v527, -480.5
        %v560 = vmul.f32 %v528, -480.5
        %v561 = vmul.f32 %v529, -480.5
        %v562 = vmul.f32 %v530, -480.5
        %v563 = vmul.f32 %v531, -480.5
        %v564 = vmul.f32 %v532, -480.5
        %v565 = vmul.f32 %v533, -480.5
        %v566 = vmul.f32 %v534, -480.5
        %v567 = vmul.f32 %v535, -480.5
        %v568 = vmul.f32 %v536, -480.5
        %v569 = vmul.f32 %v537, -480.5
        %v570 = vmul.f32 %v538, -480.5
        %v571 = vmul.f32 %v539, -480.5
        %v572 = vmul.f32 %v540, -480.5
        %v573 = vmul.f32 %v541, %v509
        %v574 = vmul.f32 %v542, %v510
        %v575 = vmul.f32 %v543, %v511
        %v576 = vmul.f32 %v544, %v512
        %v577 = vmul.f32 %v545, %v513
        %v578 = vmul.f32 %v546, %v514
        %v579 = vmul.f32 %v547, %v515
        %v580 = vmul.f32 %v548, %v516
        %v581 = vmul.f32 %v549, %v517
        %v582 = vmul.f32 %v550, %v518
        %v583 = vmul.f32 %v551, %v519
        %v584 = vmul.f32 %v552, %v520
        %v585 = vmul.f32 %v553, %v521
        %v586 = vmul.f32 %v554, %v522
        %v587 = vmul.f32 %v555, %v523
        %v588 = vmul.f32 %v556, %v524
        %v589 = vmul.f32 %v557, %v525
        %v590 = vmul.f32 %v558, %v526
        %v591 = vmul.f32 %v559, %v527
        %v592 = vmul.f32 %v560, %v528
        %v593 = vmul.f32 %v561, %v529
        %v594 = vmul.f32 %v562, %v530
        %v595 = vmul.f32 %v563, %v531
        %v596 = vmul.f32 %v564, %v532
        %v597 = vmul.f32 %v565, %v533
        %v598 = vmul.f32 %v566, %v534
        %v599 = vmul.f32 %v567, %v535
        %v600 = vmul.f32 %v568, %v536
        %v601 = vmul.f32 %v569, %v537
        %v602 = vmul.f32 %v570, %v538
        %v603 = vmul.f32 %v571, %v539
        %v604 = vmul.f32 %v572, %v540
        %v605 = vmul.f32 %v573, 1.442695
        %v606 = vpow.pop %v605
        %v607 = vmul.f32 %v574, 1.442695
        %v608 = vpow.pop %v607
        %v609 = vmul.f32 %v575, 1.442695
        %v610 = vpow.pop %v609
        %v611 = vmul.f32 %v576, 1.442695
        %v612 = vpow.pop %v611
        %v613 = vmul.f32 %v577, 1.442695
        %v614 = vpow.pop %v613
        %v615 = vmul.f32 %v578, 1.442695
        %v616 = vpow.pop %v615
        %v617 = vmul.f32 %v579, 1.442695
        %v618 = vpow.pop %v617
        %v619 = vmul.f32 %v580, 1.442695
        %v620 = vpow.pop %v619
        %v621 = vmul.f32 %v581, 1.442695
        %v622 = vpow.pop %v621
        %v623 = vmul.f32 %v582, 1.442695
        %v624 = vpow.pop %v623
        %v625 = vmul.f32 %v583, 1.442695
        %v626 = vpow.pop %v625
        %v627 = vmul.f32 %v584, 1.442695
        %v628 = vpow.pop %v627
        %v629 = vmul.f32 %v585, 1.442695
        %v630 = vpow.pop %v629
        %v631 = vmul.f32 %v586, 1.442695
        %v632 = vpow.pop %v631
        %v633 = vmul.f32 %v587, 1.442695
        %v634 = vpow.pop %v633
        %v635 = vmul.f32 %v588, 1.442695
        %v636 = vpow.pop %v635
        %v637 = vmul.f32 %v589, 1.442695
        %v638 = vpow.pop %v637
        %v639 = vmul.f32 %v590, 1.442695
        %v640 = vpow.pop %v639
        %v641 = vmul.f32 %v591, 1.442695
        %v642 = vpow.pop %v641
        %v643 = vmul.f32 %v592, 1.442695
        %v644 = vpow.pop %v643
        %v645 = vmul.f32 %v593, 1.442695
        %v646 = vpow.pop %v645
        %v647 = vmul.f32 %v594, 1.442695
        %v648 = vpow.pop %v647
        %v649 = vmul.f32 %v595, 1.442695
        %v650 = vpow.pop %v649
        %v651 = vmul.f32 %v596, 1.442695
        %v652 = vpow.pop %v651
        %v653 = vmul.f32 %v597, 1.442695
        %v654 = vpow.pop %v653
        %v655 = vmul.f32 %v598, 1.442695
        %v656 = vpow.pop %v655
        %v657 = vmul.f32 %v599, 1.442695
        %v658 = vpow.pop %v657
        %v659 = vmul.f32 %v600, 1.442695
        %v660 = vpow.pop %v659
        %v661 = vmul.f32 %v601, 1.442695
        %v662 = vpow.pop %v661
        %v663 = vmul.f32 %v602, 1.442695
        %v664 = vpow.pop %v663
        %v665 = vmul.f32 %v603, 1.442695
        %v666 = vpow.pop %v665
        %v667 = vmul.f32 %v604, 1.442695
        %v668 = vpow.pop %v667
        %v669 = vadd.f32 %v405, %v421
        %v670 = vadd.f32 %v669, %v437
        %v671 = vadd.f32 %v670, %v453
        %v672 = vrot.slane %v671, 4
        %v673 = vadd.f32 %v671, %v672
        %v674 = vrot.slane %v673, 2
        %v675 = vadd.f32 %v673, %v674
        %v676 = vrot.slane %v675, 1
        %v677 = vadd.f32 %v675, %v676
        %v678 = vadd.f32 %v407, %v423
        %v679 = vadd.f32 %v678, %v439
        %v680 = vadd.f32 %v679, %v455
        %v681 = vrot.slane %v680, 4
        %v682 = vadd.f32 %v680, %v681
        %v683 = vrot.slane %v682, 2
        %v684 = vadd.f32 %v682, %v683
        %v685 = vrot.slane %v684, 1
        %v686 = vadd.f32 %v684, %v685
        %v687 = vadd.f32 %v409, %v425
        %v688 = vadd.f32 %v687, %v441
        %v689 = vadd.f32 %v688, %v457
        %v690 = vrot.slane %v689, 4
        %v691 = vadd.f32 %v689, %v690
        %v692 = vrot.slane %v691, 2
        %v693 = vadd.f32 %v691, %v692
        %v694 = vrot.slane %v693, 1
        %v695 = vadd.f32 %v693, %v694
        %v696 = vadd.f32 %v411, %v427
        %v697 = vadd.f32 %v696, %v443
        %v698 = vadd.f32 %v697, %v459
        %v699 = vrot.slane %v698, 4
        %v700 = vadd.f32 %v698, %v699
        %v701 = vrot.slane %v700, 2
        %v702 = vadd.f32 %v700, %v701
        %v703 = vrot.slane %v702, 1
        %v704 = vadd.f32 %v702, %v703
        %v705 = vadd.f32 %v413, %v429
        %v706 = vadd.f32 %v705, %v445
        %v707 = vadd.f32 %v706, %v461
        %v708 = vrot.slane %v707, 4
        %v709 = vadd.f32 %v707, %v708
        %v710 = vrot.slane %v709, 2
        %v711 = vadd.f32 %v709, %v710
        %v712 = vrot.slane %v711, 1
        %v713 = vadd.f32 %v711, %v712
        %v714 = vadd.f32 %v415, %v431
        %v715 = vadd.f32 %v714, %v447
        %v716 = vadd.f32 %v715, %v463
        %v717 = vrot.slane %v716, 4
        %v718 = vadd.f32 %v716, %v717
        %v719 = vrot.slane %v718, 2
        %v720 = vadd.f32 %v718, %v719
        %v721 = vrot.slane %v720, 1
        %v722 = vadd.f32 %v720, %v721
        %v723 = vadd.f32 %v417, %v433
        %v724 = vadd.f32 %v723, %v449
        %v725 = vadd.f32 %v724, %v465
        %v726 = vrot.slane %v725, 4
        %v727 = vadd.f32 %v725, %v726
        %v728 = vrot.slane %v727, 2
        %v729 = vadd.f32 %v727, %v728
        %v730 = vrot.slane %v729, 1
        %v731 = vadd.f32 %v729, %v730
        %v732 = vadd.f32 %v419, %v435
        %v733 = vadd.f32 %v732, %v451
        %v734 = vadd.f32 %v733, %v467
        %v735 = vrot.slane %v734, 4
        %v736 = vadd.f32 %v734, %v735
        %v737 = vrot.slane %v736, 2
        %v738 = vadd.f32 %v736, %v737
        %v739 = vrot.slane %v738, 1
        %v740 = vadd.f32 %v738, %v739
        %v741 = vadd.f32 %v606, %v622
        %v742 = vadd.f32 %v741, %v638
        %v743 = vadd.f32 %v742, %v654
        %v744 = vrot.slane %v743, 4
        %v745 = vadd.f32 %v743, %v744
        %v746 = vrot.slane %v745, 2
        %v747 = vadd.f32 %v745, %v746
        %v748 = vrot.slane %v747, 1
        %v749 = vadd.f32 %v747, %v748
        %v750 = vadd.f32 %v608, %v624
        %v751 = vadd.f32 %v750, %v640
        %v752 = vadd.f32 %v751, %v656
        %v753 = vrot.slane %v752, 4
        %v754 = vadd.f32 %v752, %v753
        %v755 = vrot.slane %v754, 2
        %v756 = vadd.f32 %v754, %v755
        %v757 = vrot.slane %v756, 1
        %v758 = vadd.f32 %v756, %v757
        %v759 = vadd.f32 %v610, %v626
        %v760 = vadd.f32 %v759, %v642
        %v761 = vadd.f32 %v760, %v658
        %v762 = vrot.slane %v761, 4
        %v763 = vadd.f32 %v761, %v762
        %v764 = vrot.slane %v763, 2
        %v765 = vadd.f32 %v763, %v764
        %v766 = vrot.slane %v765, 1
        %v767 = vadd.f32 %v765, %v766
        %v768 = vadd.f32 %v612, %v628
        %v769 = vadd.f32 %v768, %v644
        %v770 = vadd.f32 %v769, %v660
        %v771 = vrot.slane %v770, 4
        %v772 = vadd.f32 %v770, %v771
        %v773 = vrot.slane %v772, 2
        %v774 = vadd.f32 %v772, %v773
        %v775 = vrot.slane %v774, 1
        %v776 = vadd.f32 %v774, %v775
        %v777 = vadd.f32 %v614, %v630
        %v778 = vadd.f32 %v777, %v646
        %v779 = vadd.f32 %v778, %v662
        %v780 = vrot.slane %v779, 4
        %v781 = vadd.f32 %v779, %v780
        %v782 = vrot.slane %v781, 2
        %v783 = vadd.f32 %v781, %v782
        %v784 = vrot.slane %v783, 1
        %v785 = vadd.f32 %v783, %v784
        %v786 = vadd.f32 %v616, %v632
        %v787 = vadd.f32 %v786, %v648
        %v788 = vadd.f32 %v787, %v664
        %v789 = vrot.slane %v788, 4
        %v790 = vadd.f32 %v788, %v789
        %v791 = vrot.slane %v790, 2
        %v792 = vadd.f32 %v790, %v791
        %v793 = vrot.slane %v792, 1
        %v794 = vadd.f32 %v792, %v793
        %v795 = vadd.f32 %v618, %v634
        %v796 = vadd.f32 %v795, %v650
        %v797 = vadd.f32 %v796, %v666
        %v798 = vrot.slane %v797, 4
        %v799 = vadd.f32 %v797, %v798
        %v800 = vrot.slane %v799, 2
        %v801 = vadd.f32 %v799, %v800
        %v802 = vrot.slane %v801, 1
        %v803 = vadd.f32 %v801, %v802
        %v804 = vadd.f32 %v620, %v636
        %v805 = vadd.f32 %v804, %v652
        %v806 = vadd.f32 %v805, %v668
        %v807 = vrot.slane %v806, 4
        %v808 = vadd.f32 %v806, %v807
        %v809 = vrot.slane %v808, 2
        %v810 = vadd.f32 %v808, %v809
        %v811 = vrot.slane %v810, 1
        %v812 = vadd.f32 %v810, %v811
        %v813 = vmul.f32 %v677, %v749
        %v814 = vmul.f32 %v686, %v758
        %v815 = vmul.f32 %v695, %v767
        %v816 = vmul.f32 %v704, %v776
        %v817 = vmul.f32 %v713, %v785
        %v818 = vmul.f32 %v722, %v794
        %v819 = vmul.f32 %v731, %v803
        %v820 = vmul.f32 %v740, %v812
        %v821 = vrcp.pop %v813
        %v822 = vrcp.pop %v814
        %v823 = vrcp.pop %v815
        %v824 = vrcp.pop %v816
        %v825 = vrcp.pop %v817
        %v826 = vrcp.pop %v818
        %v827 = vrcp.pop %v819
        %v828 = vrcp.pop %v820
        %v829 = vmul.f32 %v405, %v821
        %v830 = vmul.f32 %v407, %v822
        %v831 = vmul.f32 %v409, %v823
        %v832 = vmul.f32 %v411, %v824
        %v833 = vmul.f32 %v413, %v825
        %v834 = vmul.f32 %v415, %v826
        %v835 = vmul.f32 %v417, %v827
        %v836 = vmul.f32 %v419, %v828
        %v837 = vmul.f32 %v421, %v821
        %v838 = vmul.f32 %v423, %v822
        %v839 = vmul.f32 %v425, %v823
        %v840 = vmul.f32 %v427, %v824
        %v841 = vmul.f32 %v429, %v825
        %v842 = vmul.f32 %v431, %v826
        %v843 = vmul.f32 %v433, %v827
        %v844 = vmul.f32 %v435, %v828
        %v845 = vmul.f32 %v437, %v821
        %v846 = vmul.f32 %v439, %v822
        %v847 = vmul.f32 %v441, %v823
        %v848 = vmul.f32 %v443, %v824
        %v849 = vmul.f32 %v445, %v825
        %v850 = vmul.f32 %v447, %v826
        %v851 = vmul.f32 %v449, %v827
        %v852 = vmul.f32 %v451, %v828
        %v853 = vmul.f32 %v453, %v821
        %v854 = vmul.f32 %v455, %v822
        %v855 = vmul.f32 %v457, %v823
        %v856 = vmul.f32 %v459, %v824
        %v857 = vmul.f32 %v461, %v825
        %v858 = vmul.f32 %v463, %v826
        %v859 = vmul.f32 %v465, %v827
        %v860 = vmul.f32 %v467, %v828
        %861 = vmatprep.subr.mxu0 %v608
        %862 = vmatpush1.xpose.msra.mxu0 %v606
        %863 = vmatprep.subr.mxu0 %v624
        %864 = vmatpush1.xpose.msra.mxu0 %v622
        %865 = vmatprep.subr.mxu0 %v640
        %866 = vmatpush1.xpose.msra.mxu0 %v638
        %867 = vmatprep.subr.mxu0 %v656
        %868 = vmatpush1.xpose.msra.mxu0 %v654
        %869 = vmatprep.subr.mxu0 0.0
        %870 = vmatpush1.xpose.msra.mxu0 0.0
        %871 = vmatprep.subr.mxu0 0.0
        %872 = vmatpush1.xpose.msra.mxu0 0.0
        %873 = vmatprep.subr.mxu0 0.0
        %874 = vmatpush1.xpose.msra.mxu0 0.0
        %875 = vmatprep.subr.mxu0 0.0
        %876 = vmatpush1.xpose.msra.mxu0 0.0
        %877 = vmatprep.subr.mxu0 0.0
        %878 = vmatpush1.xpose.msra.mxu0 0.0
        %879 = vmatprep.subr.mxu0 0.0
        %880 = vmatpush1.xpose.msra.mxu0 0.0
        %881 = vmatprep.subr.mxu0 0.0
        %882 = vmatpush1.xpose.msra.mxu0 0.0
        %883 = vmatprep.subr.mxu0 0.0
        %884 = vmatpush1.xpose.msra.mxu0 0.0
        %885 = vmatprep.subr.mxu0 0.0
        %886 = vmatpush1.xpose.msra.mxu0 0.0
        %887 = vmatprep.subr.mxu0 0.0
        %888 = vmatpush1.xpose.msra.mxu0 0.0
        %889 = vmatprep.subr.mxu0 0.0
        %890 = vmatpush1.xpose.msra.mxu0 0.0
        %891 = vmatprep.subr.mxu0 0.0
        %892 = vmatpush1.xpose.msra.mxu0 0.0
        %893 = vmatprep.subr.mxu0 0.0
        %894 = vmatpush1.xpose.msra.mxu0 0.0
        %895 = vmatprep.subr.mxu0 0.0
        %896 = vmatpush1.xpose.msra.mxu0 0.0
        %897 = vmatprep.subr.mxu0 0.0
        %898 = vmatpush1.xpose.msra.mxu0 0.0
        %899 = vmatprep.subr.mxu0 0.0
        %900 = vmatpush1.xpose.msra.mxu0 0.0
        %901 = vmatprep.subr.mxu0 0.0
        %902 = vmatpush1.xpose.msra.mxu0 0.0
        %903 = vmatprep.subr.mxu0 0.0
        %904 = vmatpush1.xpose.msra.mxu0 0.0
        %905 = vmatprep.subr.mxu0 0.0
        %906 = vmatpush1.xpose.msra.mxu0 0.0
        %907 = vmatprep.subr.mxu0 0.0
        %908 = vmatpush1.xpose.msra.mxu0 0.0
        %909 = vmatprep.subr.mxu0 0.0
        %910 = vmatpush1.xpose.msra.mxu0 0.0
        %911 = vmatprep.subr.mxu0 0.0
        %912 = vmatpush1.xpose.msra.mxu0 0.0
        %913 = vmatprep.subr.mxu0 0.0
        %914 = vmatpush1.xpose.msra.mxu0 0.0
        %915 = vmatprep.subr.mxu0 0.0
        %916 = vmatpush1.xpose.msra.mxu0 0.0
        %917 = vmatprep.subr.mxu0 0.0
        %918 = vmatpush1.xpose.msra.mxu0 0.0
        %919 = vmatprep.subr.mxu0 0.0
        %920 = vmatpush1.xpose.msra.mxu0 0.0
        %921 = vmatprep.subr.mxu0 0.0
        %922 = vmatpush1.xpose.msra.mxu0 0.0
        %923 = vmatprep.subr.mxu0 0.0
        %924 = vmatpush1.xpose.msra.mxu0 0.0
        %925 = vmatprep.mubr.f32.mxu0 %v830
        %926 = vmatmul.mubr.f32.gmra.mrb[0].mxu0 %v829
        %v927 = vpop.f32.mrb[0].mxu0
        %v928 = vadd.f32 0.0, %v927
        %v929 = vpop.f32.mrb[0].mxu0
        %930 = vmatprep.mubr.f32.mxu0 %v838
        %931 = vmatmul.mubr.f32.gmra.mrb[0].mxu0 %v837
        %v932 = vpop.f32.mrb[0].mxu0
        %v933 = vadd.f32 0.0, %v932
        %v934 = vpop.f32.mrb[0].mxu0
        %935 = vmatprep.mubr.f32.mxu0 %v846
        %936 = vmatmul.mubr.f32.gmra.mrb[0].mxu0 %v845
        %v937 = vpop.f32.mrb[0].mxu0
        %v938 = vadd.f32 0.0, %v937
        %v939 = vpop.f32.mrb[0].mxu0
        %940 = vmatprep.mubr.f32.mxu0 %v854
        %941 = vmatmul.mubr.f32.gmra.mrb[0].mxu0 %v853
        %v942 = vpop.f32.mrb[0].mxu0
        %v943 = vadd.f32 0.0, %v942
        %v944 = vpop.f32.mrb[0].mxu0
        %945 = vdwg.mxu0
        %946 = vmatprep.subr.mxu0 %v612
        %947 = vmatpush1.xpose.msra.mxu0 %v610
        %948 = vmatprep.subr.mxu0 %v628
        %949 = vmatpush1.xpose.msra.mxu0 %v626
        %950 = vmatprep.subr.mxu0 %v644
        %951 = vmatpush1.xpose.msra.mxu0 %v642
        %952 = vmatprep.subr.mxu0 %v660
        %953 = vmatpush1.xpose.msra.mxu0 %v658
        %954 = vmatprep.subr.mxu0 0.0
        %955 = vmatpush1.xpose.msra.mxu0 0.0
        %956 = vmatprep.subr.mxu0 0.0
        %957 = vmatpush1.xpose.msra.mxu0 0.0
        %958 = vmatprep.subr.mxu0 0.0
        %959 = vmatpush1.xpose.msra.mxu0 0.0
        %960 = vmatprep.subr.mxu0 0.0
        %961 = vmatpush1.xpose.msra.mxu0 0.0
        %962 = vmatprep.subr.mxu0 0.0
        %963 = vmatpush1.xpose.msra.mxu0 0.0
        %964 = vmatprep.subr.mxu0 0.0
        %965 = vmatpush1.xpose.msra.mxu0 0.0
        %966 = vmatprep.subr.mxu0 0.0
        %967 = vmatpush1.xpose.msra.mxu0 0.0
        %968 = vmatprep.subr.mxu0 0.0
        %969 = vmatpush1.xpose.msra.mxu0 0.0
        %970 = vmatprep.subr.mxu0 0.0
        %971 = vmatpush1.xpose.msra.mxu0 0.0
        %972 = vmatprep.subr.mxu0 0.0
        %973 = vmatpush1.xpose.msra.mxu0 0.0
        %974 = vmatprep.subr.mxu0 0.0
        %975 = vmatpush1.xpose.msra.mxu0 0.0
        %976 = vmatprep.subr.mxu0 0.0
        %977 = vmatpush1.xpose.msra.mxu0 0.0
        %978 = vmatprep.subr.mxu0 0.0
        %979 = vmatpush1.xpose.msra.mxu0 0.0
        %980 = vmatprep.subr.mxu0 0.0
        %981 = vmatpush1.xpose.msra.mxu0 0.0
        %982 = vmatprep.subr.mxu0 0.0
        %983 = vmatpush1.xpose.msra.mxu0 0.0
        %984 = vmatprep.subr.mxu0 0.0
        %985 = vmatpush1.xpose.msra.mxu0 0.0
        %986 = vmatprep.subr.mxu0 0.0
        %987 = vmatpush1.xpose.msra.mxu0 0.0
        %988 = vmatprep.subr.mxu0 0.0
        %989 = vmatpush1.xpose.msra.mxu0 0.0
        %990 = vmatprep.subr.mxu0 0.0
        %991 = vmatpush1.xpose.msra.mxu0 0.0
        %992 = vmatprep.subr.mxu0 0.0
        %993 = vmatpush1.xpose.msra.mxu0 0.0
        %994 = vmatprep.subr.mxu0 0.0
        %995 = vmatpush1.xpose.msra.mxu0 0.0
        %996 = vmatprep.subr.mxu0 0.0
        %997 = vmatpush1.xpose.msra.mxu0 0.0
        %998 = vmatprep.subr.mxu0 0.0
        %999 = vmatpush1.xpose.msra.mxu0 0.0
        %1000 = vmatprep.subr.mxu0 0.0
        %1001 = vmatpush1.xpose.msra.mxu0 0.0
        %1002 = vmatprep.subr.mxu0 0.0
        %1003 = vmatpush1.xpose.msra.mxu0 0.0
        %1004 = vmatprep.subr.mxu0 0.0
        %1005 = vmatpush1.xpose.msra.mxu0 0.0
        %1006 = vmatprep.subr.mxu0 0.0
        %1007 = vmatpush1.xpose.msra.mxu0 0.0
        %1008 = vmatprep.subr.mxu0 0.0
        %1009 = vmatpush1.xpose.msra.mxu0 0.0
        %1010 = vmatprep.mubr.f32.mxu0 %v832
        %1011 = vmatmul.mubr.f32.gmra.mrb[0].mxu0 %v831
        %v1012 = vpop.f32.mrb[0].mxu0
        %v1013 = vadd.f32 %v928, %v1012
        %v1014 = vpop.f32.mrb[0].mxu0
        %1015 = vmatprep.mubr.f32.mxu0 %v840
        %1016 = vmatmul.mubr.f32.gmra.mrb[0].mxu0 %v839
        %v1017 = vpop.f32.mrb[0].mxu0
        %v1018 = vadd.f32 %v933, %v1017
        %v1019 = vpop.f32.mrb[0].mxu0
        %1020 = vmatprep.mubr.f32.mxu0 %v848
        %1021 = vmatmul.mubr.f32.gmra.mrb[0].mxu0 %v847
        %v1022 = vpop.f32.mrb[0].mxu0
        %v1023 = vadd.f32 %v938, %v1022
        %v1024 = vpop.f32.mrb[0].mxu0
        %1025 = vmatprep.mubr.f32.mxu0 %v856
        %1026 = vmatmul.mubr.f32.gmra.mrb[0].mxu0 %v855
        %v1027 = vpop.f32.mrb[0].mxu0
        %v1028 = vadd.f32 %v943, %v1027
        %v1029 = vpop.f32.mrb[0].mxu0
        %1030 = vdwg.mxu0
        %1031 = vmatprep.subr.mxu0 %v616
        %1032 = vmatpush1.xpose.msra.mxu0 %v614
        %1033 = vmatprep.subr.mxu0 %v632
        %1034 = vmatpush1.xpose.msra.mxu0 %v630
        %1035 = vmatprep.subr.mxu0 %v648
        %1036 = vmatpush1.xpose.msra.mxu0 %v646
        %1037 = vmatprep.subr.mxu0 %v664
        %1038 = vmatpush1.xpose.msra.mxu0 %v662
        %1039 = vmatprep.subr.mxu0 0.0
        %1040 = vmatpush1.xpose.msra.mxu0 0.0
        %1041 = vmatprep.subr.mxu0 0.0
        %1042 = vmatpush1.xpose.msra.mxu0 0.0
        %1043 = vmatprep.subr.mxu0 0.0
        %1044 = vmatpush1.xpose.msra.mxu0 0.0
        %1045 = vmatprep.subr.mxu0 0.0
        %1046 = vmatpush1.xpose.msra.mxu0 0.0
        %1047 = vmatprep.subr.mxu0 0.0
        %1048 = vmatpush1.xpose.msra.mxu0 0.0
        %1049 = vmatprep.subr.mxu0 0.0
        %1050 = vmatpush1.xpose.msra.mxu0 0.0
        %1051 = vmatprep.subr.mxu0 0.0
        %1052 = vmatpush1.xpose.msra.mxu0 0.0
        %1053 = vmatprep.subr.mxu0 0.0
        %1054 = vmatpush1.xpose.msra.mxu0 0.0
        %1055 = vmatprep.subr.mxu0 0.0
        %1056 = vmatpush1.xpose.msra.mxu0 0.0
        %1057 = vmatprep.subr.mxu0 0.0
        %1058 = vmatpush1.xpose.msra.mxu0 0.0
        %1059 = vmatprep.subr.mxu0 0.0
        %1060 = vmatpush1.xpose.msra.mxu0 0.0
        %1061 = vmatprep.subr.mxu0 0.0
        %1062 = vmatpush1.xpose.msra.mxu0 0.0
        %1063 = vmatprep.subr.mxu0 0.0
        %1064 = vmatpush1.xpose.msra.mxu0 0.0
        %1065 = vmatprep.subr.mxu0 0.0
        %1066 = vmatpush1.xpose.msra.mxu0 0.0
        %1067 = vmatprep.subr.mxu0 0.0
        %1068 = vmatpush1.xpose.msra.mxu0 0.0
        %1069 = vmatprep.subr.mxu0 0.0
        %1070 = vmatpush1.xpose.msra.mxu0 0.0
        %1071 = vmatprep.subr.mxu0 0.0
        %1072 = vmatpush1.xpose.msra.mxu0 0.0
        %1073 = vmatprep.subr.mxu0 0.0
        %1074 = vmatpush1.xpose.msra.mxu0 0.0
        %1075 = vmatprep.subr.mxu0 0.0
        %1076 = vmatpush1.xpose.msra.mxu0 0.0
        %1077 = vmatprep.subr.mxu0 0.0
        %1078 = vmatpush1.xpose.msra.mxu0 0.0
        %1079 = vmatprep.subr.mxu0 0.0
        %1080 = vmatpush1.xpose.msra.mxu0 0.0
        %1081 = vmatprep.subr.mxu0 0.0
        %1082 = vmatpush1.xpose.msra.mxu0 0.0
        %1083 = vmatprep.subr.mxu0 0.0
        %1084 = vmatpush1.xpose.msra.mxu0 0.0
        %1085 = vmatprep.subr.mxu0 0.0
        %1086 = vmatpush1.xpose.msra.mxu0 0.0
        %1087 = vmatprep.subr.mxu0 0.0
        %1088 = vmatpush1.xpose.msra.mxu0 0.0
        %1089 = vmatprep.subr.mxu0 0.0
        %1090 = vmatpush1.xpose.msra.mxu0 0.0
        %1091 = vmatprep.subr.mxu0 0.0
        %1092 = vmatpush1.xpose.msra.mxu0 0.0
        %1093 = vmatprep.subr.mxu0 0.0
        %1094 = vmatpush1.xpose.msra.mxu0 0.0
        %1095 = vmatprep.mubr.f32.mxu0 %v834
        %1096 = vmatmul.mubr.f32.gmra.mrb[0].mxu0 %v833
        %v1097 = vpop.f32.mrb[0].mxu0
        %v1098 = vadd.f32 %v1013, %v1097
        %v1099 = vpop.f32.mrb[0].mxu0
        %1100 = vmatprep.mubr.f32.mxu0 %v842
        %1101 = vmatmul.mubr.f32.gmra.mrb[0].mxu0 %v841
        %v1102 = vpop.f32.mrb[0].mxu0
        %v1103 = vadd.f32 %v1018, %v1102
        %v1104 = vpop.f32.mrb[0].mxu0
        %1105 = vmatprep.mubr.f32.mxu0 %v850
        %1106 = vmatmul.mubr.f32.gmra.mrb[0].mxu0 %v849
        %v1107 = vpop.f32.mrb[0].mxu0
        %v1108 = vadd.f32 %v1023, %v1107
        %v1109 = vpop.f32.mrb[0].mxu0
        %1110 = vmatprep.mubr.f32.mxu0 %v858
        %1111 = vmatmul.mubr.f32.gmra.mrb[0].mxu0 %v857
        %v1112 = vpop.f32.mrb[0].mxu0
        %v1113 = vadd.f32 %v1028, %v1112
        %v1114 = vpop.f32.mrb[0].mxu0
        %1115 = vdwg.mxu0
        %1116 = vmatprep.subr.mxu0 %v620
        %1117 = vmatpush1.xpose.msra.mxu0 %v618
        %1118 = vmatprep.subr.mxu0 %v636
        %1119 = vmatpush1.xpose.msra.mxu0 %v634
        %1120 = vmatprep.subr.mxu0 %v652
        %1121 = vmatpush1.xpose.msra.mxu0 %v650
        %1122 = vmatprep.subr.mxu0 %v668
        %1123 = vmatpush1.xpose.msra.mxu0 %v666
        %1124 = vmatprep.subr.mxu0 0.0
        %1125 = vmatpush1.xpose.msra.mxu0 0.0
        %1126 = vmatprep.subr.mxu0 0.0
        %1127 = vmatpush1.xpose.msra.mxu0 0.0
        %1128 = vmatprep.subr.mxu0 0.0
        %1129 = vmatpush1.xpose.msra.mxu0 0.0
        %1130 = vmatprep.subr.mxu0 0.0
        %1131 = vmatpush1.xpose.msra.mxu0 0.0
        %1132 = vmatprep.subr.mxu0 0.0
        %1133 = vmatpush1.xpose.msra.mxu0 0.0
        %1134 = vmatprep.subr.mxu0 0.0
        %1135 = vmatpush1.xpose.msra.mxu0 0.0
        %1136 = vmatprep.subr.mxu0 0.0
        %1137 = vmatpush1.xpose.msra.mxu0 0.0
        %1138 = vmatprep.subr.mxu0 0.0
        %1139 = vmatpush1.xpose.msra.mxu0 0.0
        %1140 = vmatprep.subr.mxu0 0.0
        %1141 = vmatpush1.xpose.msra.mxu0 0.0
        %1142 = vmatprep.subr.mxu0 0.0
        %1143 = vmatpush1.xpose.msra.mxu0 0.0
        %1144 = vmatprep.subr.mxu0 0.0
        %1145 = vmatpush1.xpose.msra.mxu0 0.0
        %1146 = vmatprep.subr.mxu0 0.0
        %1147 = vmatpush1.xpose.msra.mxu0 0.0
        %1148 = vmatprep.subr.mxu0 0.0
        %1149 = vmatpush1.xpose.msra.mxu0 0.0
        %1150 = vmatprep.subr.mxu0 0.0
        %1151 = vmatpush1.xpose.msra.mxu0 0.0
        %1152 = vmatprep.subr.mxu0 0.0
        %1153 = vmatpush1.xpose.msra.mxu0 0.0
        %1154 = vmatprep.subr.mxu0 0.0
        %1155 = vmatpush1.xpose.msra.mxu0 0.0
        %1156 = vmatprep.subr.mxu0 0.0
        %1157 = vmatpush1.xpose.msra.mxu0 0.0
        %1158 = vmatprep.subr.mxu0 0.0
        %1159 = vmatpush1.xpose.msra.mxu0 0.0
        %1160 = vmatprep.subr.mxu0 0.0
        %1161 = vmatpush1.xpose.msra.mxu0 0.0
        %1162 = vmatprep.subr.mxu0 0.0
        %1163 = vmatpush1.xpose.msra.mxu0 0.0
        %1164 = vmatprep.subr.mxu0 0.0
        %1165 = vmatpush1.xpose.msra.mxu0 0.0
        %1166 = vmatprep.subr.mxu0 0.0
        %1167 = vmatpush1.xpose.msra.mxu0 0.0
        %1168 = vmatprep.subr.mxu0 0.0
        %1169 = vmatpush1.xpose.msra.mxu0 0.0
        %1170 = vmatprep.subr.mxu0 0.0
        %1171 = vmatpush1.xpose.msra.mxu0 0.0
        %1172 = vmatprep.subr.mxu0 0.0
        %1173 = vmatpush1.xpose.msra.mxu0 0.0
        %1174 = vmatprep.subr.mxu0 0.0
        %1175 = vmatpush1.xpose.msra.mxu0 0.0
        %1176 = vmatprep.subr.mxu0 0.0
        %1177 = vmatpush1.xpose.msra.mxu0 0.0
        %1178 = vmatprep.subr.mxu0 0.0
        %1179 = vmatpush1.xpose.msra.mxu0 0.0
        %1180 = vmatprep.mubr.f32.mxu0 %v836
        %1181 = vmatmul.mubr.f32.gmra.mrb[0].mxu0 %v835
        %v1182 = vpop.f32.mrb[0].mxu0
        %v1183 = vadd.f32 %v1098, %v1182
        %v1184 = vpop.f32.mrb[0].mxu0
        %1185 = vmatprep.mubr.f32.mxu0 %v844
        %1186 = vmatmul.mubr.f32.gmra.mrb[0].mxu0 %v843
        %v1187 = vpop.f32.mrb[0].mxu0
        %v1188 = vadd.f32 %v1103, %v1187
        %v1189 = vpop.f32.mrb[0].mxu0
        %1190 = vmatprep.mubr.f32.mxu0 %v852
        %1191 = vmatmul.mubr.f32.gmra.mrb[0].mxu0 %v851
        %v1192 = vpop.f32.mrb[0].mxu0
        %v1193 = vadd.f32 %v1108, %v1192
        %v1194 = vpop.f32.mrb[0].mxu0
        %1195 = vmatprep.mubr.f32.mxu0 %v860
        %1196 = vmatmul.mubr.f32.gmra.mrb[0].mxu0 %v859
        %v1197 = vpop.f32.mrb[0].mxu0
        %v1198 = vadd.f32 %v1113, %v1197
        %v1199 = vpop.f32.mrb[0].mxu0
        %1200 = vdwg.mxu0
        %v1201 = vld [vmem:[%s232] sm:$0xff]
        %v1202 = vld [vmem:[%s232 + $0x8] sm:$0xff]
        %v1203 = vld [vmem:[%s232 + $0x10] sm:$0xff]
        %v1204 = vld [vmem:[%s232 + $0x18] sm:$0xff]
        %v1205 = vadd.f32 %v1201, %v1183
        %v1206 = vadd.f32 %v1202, %v1188
        %v1207 = vadd.f32 %v1203, %v1193
        %v1208 = vadd.f32 %v1204, %v1198
        %vm1209 = vcmask 261120
        %1210 = vst.msk [vmem:[%s232] sm:$0xff] %vm1209, %v1205
        %1211 = vst.msk [vmem:[%s232 + $0x8] sm:$0xff] %vm1209, %v1206
        %1212 = vst.msk [vmem:[%s232 + $0x10] sm:$0xff] %vm1209, %v1207
        %1213 = vst.msk [vmem:[%s232 + $0x18] sm:$0xff] %vm1209, %v1208
        %s1214 = sand.u32 %s111, 1
        %s1215 = scalar_lea.sflag [#allocation4], %s1214
        %s1216 = sand.u32 %s111, 1
        %s1217 = smul.addr %s1216, 32
        %s1218 = scalar_lea.vmem [#allocation7], %s1217
        // Predicated region
        $region41: #{tpu_custom_call.1} parent=27 // pred_check
          %p1219 = pneg %p121
        $region42: #{tpu_custom_call.1} parent=27 // pred_check_branch
          %1221 = sbr.rel (%p1219) target = $region44
        $region43: #{tpu_custom_call.1} parent=27 // pred_region
          %s1223 = ssub.s32 512, 512
          %1224 = vsyncadd %s1215, %s1223
          %s1225 = smul.addr %s28, 4
          %s1226 = smul.addr %s27, 4
          %s1227 = sadd.s32 %s1225, %s1226
          %s1228 = smul.addr %s1227, 128
          %s1229 = scalar_lea.hbm %s2, %s1228
          %s1230 = sshll.u32 %s1218, 4
          %s1231 = int_to_ptr.vmem [resolvable:$true] %s1230
          %1236 = dma.vmem_to_hbm [thread:$0]  %s1231, 512, %s1229, %s1215, 128, 128, 8
        $region44: #{tpu_custom_call.1} parent=27 // pred_fallthru
          _
      $region28: #{tpu_custom_call.1} parent=5 // pred_fallthru
        _
      %p1237 = scmp.le.s32.totalorder 2, %s17
      // Predicated region
      $region45: #{tpu_custom_call.1} parent=5 // pred_check
        %p1238 = pneg %p1237
      $region46: #{tpu_custom_call.1} parent=5 // pred_check_branch
        %1240 = sbr.rel (%p1238) target = $region48
      $region47: #{tpu_custom_call.1} parent=5 // pred_region
        %s1241 = ssub.s32 %s17, 2
        // Predicated region
        $region49: #{tpu_custom_call.1} parent=47 // pred_check
          %p1242 = pneg %p127
        $region50: #{tpu_custom_call.1} parent=47 // pred_check_branch
          %1244 = sbr.rel (%p1242) target = $region52
        $region51: #{tpu_custom_call.1} parent=47 // pred_region
          %s1245 = sand.u32 %s112, 1
          %s1246 = scalar_lea.sflag [#allocation4], %s1245
          %s1247 = sand.u32 %s112, 1
          %s1248 = smul.addr %s1247, 32
          %s1249 = scalar_lea.vmem [#allocation7], %s1248
          %1250 = dma.done %s1246, 512
        $region52: #{tpu_custom_call.1} parent=47 // pred_fallthru
          _
      $region48: #{tpu_custom_call.1} parent=5 // pred_fallthru
        _
    $region6: #{tpu_custom_call.1} parent=1 // loop_footer
      %s21 = sadd.s32 1, %s17
    $region7: #{tpu_custom_call.1} parent=1 // loop_footer_branch
      %16 = sbr.rel target = $region3
    $region8: #{tpu_custom_call.1} parent=1 // loop_exit
      _
    %1251 = vsyncpa [#allocation3], 1
    %s1252 = scalar_lea.sflag [#allocation3], 1
    %1253 = vsyncpa %s1252, 1
    %1254 = vsyncpa [#allocation6], 1
    %s1255 = scalar_lea.sflag [#allocation6], 1
    %1256 = vsyncpa %s1255, 1
    %1257 = vsyncpa [#allocation4], 1
    %s1258 = scalar_lea.sflag [#allocation4], 1
    %1259 = vsyncpa %s1258, 1

</llo_original>
